<compile_context>
chip_gen: v5e
topology: v5e:2x2
jax: 0.10.0
libtpu: 0.0.40
codegen_flags: <defaults>
</compile_context>

<pallas_src>
import jax
import jax.numpy as jnp
from jax.experimental import pallas as pl
from jax.experimental.pallas import tpu as pltpu


def _round_up(x, m):
    return (x + m - 1) // m * m


def _cdiv(a, b):
    return (a + b - 1) // b


def food_weight_kernel(cw_ref, k_ref, x_ref, o_ref):
    """out = channel_weight[c] * float(x) + k   (one cast + FMA per vreg)

    cw_ref : SMEM (C,)        float32  per-channel weights
    k_ref  : SMEM (1,)        float32  precomputed food*food_weight + bias
    x_ref  : VMEM (S_blk, L)  uint8    per-channel spatial slab (channel dim squeezed)
    o_ref  : VMEM (S_blk, L)  float32
    """
    c = pl.program_id(0)
    w = cw_ref[c]
    k = k_ref[0]
    o_ref[...] = x_ref[...].astype(jnp.float32) * w + k


def food_weight_forward(food, channel_map, food_weight, channel_weights, bias):
    """channel_map: (C, H, W) uint8 -> (C, H, W) float32."""
    C, H, W = channel_map.shape
    N = H * W

    # Per-channel 2-D view (S, L): lane axis L = 128 (one full vreg row) with
    # the spatial rows folded into sublanes whenever possible; otherwise fall
    # back to the natural (H, W) view (correct but lane-sparse; only hit for
    # odd-sized maps, which are tiny anyway).
    if N % 128 == 0:
        S, L = N // 128, 128
    else:
        S, L = H, W
    x3 = channel_map.reshape(C, S, L)          # free view (row-major contiguous)

    cw = jnp.asarray(channel_weights, jnp.float32).reshape(C)
    # Fold all loop-invariant scalar terms into a single SMEM cell.
    k = (jnp.asarray(food, jnp.float32).reshape(())
         * jnp.asarray(food_weight, jnp.float32).reshape(())
         + jnp.asarray(bias, jnp.float32).reshape(())).reshape(1)

    # ---- Block sizing -----------------------------------------------------
    # <=512K elements per buffer (~2 MiB f32 out) is already at the HBM
    # roofline; larger tiles gain nothing and cost VMEM.
    MAX_BLOCK_ELEMS = 512 * 1024
    l_pad = _round_up(L, 128)                          # lane tile
    max_s = max(32, (MAX_BLOCK_ELEMS // l_pad) // 32 * 32)
    if S <= max_s:
        s_blk = S                                      # full dim -> always legal
    else:
        s_blk = max_s                                  # mult. of 32 (uint8 tile); ragged tail masked
    n_s = _cdiv(S, s_blk)

    # v7x has two TensorCores: guarantee >=2 parallel blocks when there is
    # enough data to be worth splitting (C >= 2 already gives >=2 blocks).
    if C == 1 and n_s == 1 and S >= 64:
        s_blk = _round_up(_cdiv(S, 2), 32)
        n_s = _cdiv(S, s_blk)

    # ---- Padding-aware VMEM accounting (explicit limit) --------------------
    # uint8 blocks pad sublanes to 32 rows, f32 to 8 rows; lanes to 128.
    blk_in_bytes = _round_up(s_blk, 32) * l_pad * 1
    blk_out_bytes = _round_up(s_blk, 8) * l_pad * 4
    vmem_bytes = 2 * (blk_in_bytes + blk_out_bytes)    # double-buffered in + out
    vmem_limit = int(min(max(vmem_bytes + (4 << 20), 16 << 20), 48 << 20))

    grid = (C, n_s)

    out3 = pl.pallas_call(
        food_weight_kernel,
        out_shape=jax.ShapeDtypeStruct((C, S, L), jnp.float32),
        grid=grid,
        in_specs=[
            pl.BlockSpec(memory_space=pltpu.MemorySpace.SMEM),      # channel weights (C,)
            pl.BlockSpec(memory_space=pltpu.MemorySpace.SMEM),      # k = food*fw + bias
            pl.BlockSpec((None, s_blk, L), lambda c, s: (c, s, 0)),  # channel-map slab
        ],
        out_specs=pl.BlockSpec((None, s_blk, L), lambda c, s: (c, s, 0)),
        compiler_params=pltpu.CompilerParams(
            # Every (channel, sublane-block) is independent -> megacore-shardable.
            dimension_semantics=("parallel", "parallel"),
            vmem_limit_bytes=vmem_limit,
        ),
    )(cw, k, x3)

    # Free reshape back to the (C, H, W) view; no pad to strip.
    return out3.reshape(C, H, W)


if __name__ == "__main__":
    # Module constructor args (small, consistent with the forward pass).
    channels, height, width = 4, 16, 16

    key = jax.random.PRNGKey(0)
    k_fw, k_cw, k_b, k_map = jax.random.split(key, 4)

    # Deterministic parameter init mirroring reset_parameters(): uniform(-1, 1).
    food_weight = jax.random.uniform(k_fw, (1,), jnp.float32, -1.0, 1.0)
    channel_weights = jax.random.uniform(
        k_cw, (channels, 1, 1), jnp.float32, -1.0, 1.0
    )
    bias = jax.random.uniform(k_b, (1,), jnp.float32, -1.0, 1.0)

    # Inputs: integer food level and a ByteTensor-like channel map.
    food = 5
    channel_map = jax.random.randint(
        k_map, (channels, height, width), 0, 2, dtype=jnp.int32
    ).astype(jnp.uint8)

    out = food_weight_forward(food, channel_map, food_weight, channel_weights, bias)
    out = jax.block_until_ready(out)

    # Pure-JAX reference check (same broadcasting as the PyTorch forward).
    ref = (
        channel_weights * channel_map.astype(jnp.float32)
        + food * food_weight
        + bias
    )
    assert out.shape == (channels, height, width)
    assert out.dtype == jnp.float32
    assert jnp.allclose(out, ref, atol=1e-6), "mismatch vs reference"

    print("KERNEL_OK")
</pallas_src>

<mosaic_0001>
module attributes {stable_mosaic.version = 11 : i64} {
  func.func @food_weight_kernel(%arg0: i32, %arg1: i32, %arg2: memref<4xf32, #tpu.memory_space<smem>>, %arg3: memref<1xf32, #tpu.memory_space<smem>>, %arg4: memref<1x2x128xi8, #tpu.memory_space<vmem>>, %arg5: memref<1x2x128xf32, #tpu.memory_space<vmem>>) attributes {dimension_semantics = [#tpu.dimension_semantics<parallel>, #tpu.dimension_semantics<parallel>], iteration_bounds = array<i64: 4, 1>, scalar_prefetch = 0 : i64, scratch_operands = 0 : i64, tpu.core_type = #tpu.core_type<tc>, window_params = [{transform_indices = @transform_0, window_bounds = array<i64: 4>}, {transform_indices = @transform_1, window_bounds = array<i64: 1>}, {transform_indices = @transform_2, window_bounds = array<i64: 1, 2, 128>}, {transform_indices = @transform_3, window_bounds = array<i64: 1, 2, 128>}]} {
    %0 = arith.index_cast %arg0 : i32 to index
    %1 = memref.load %arg2[%0] : memref<4xf32, #tpu.memory_space<smem>>
    %c0 = arith.constant 0 : index
    %2 = memref.load %arg3[%c0] : memref<1xf32, #tpu.memory_space<smem>>
    %c0_0 = arith.constant 0 : index
    %c0_1 = arith.constant 0 : index
    %c0_2 = arith.constant 0 : index
    %3 = vector.load %arg4[%c0_0, %c0_1, %c0_2] : memref<1x2x128xi8, #tpu.memory_space<vmem>>, vector<1x2x128xi8>
    %4 = vector.shape_cast %3 : vector<1x2x128xi8> to vector<2x128xi8>
    %5 = arith.uitofp %4 : vector<2x128xi8> to vector<2x128xf32>
    %6 = vector.broadcast %1 : f32 to vector<2x128xf32>
    %7 = arith.mulf %5, %6 : vector<2x128xf32>
    %8 = vector.broadcast %2 : f32 to vector<2x128xf32>
    %9 = arith.addf %7, %8 : vector<2x128xf32>
    %c0_3 = arith.constant 0 : index
    %c0_4 = arith.constant 0 : index
    %c0_5 = arith.constant 0 : index
    %10 = vector.load %arg5[%c0_3, %c0_4, %c0_5] : memref<1x2x128xf32, #tpu.memory_space<vmem>>, vector<1x2x128xf32>
    %11 = vector.shape_cast %10 : vector<1x2x128xf32> to vector<2x128xf32>
    %12 = vector.shape_cast %9 : vector<2x128xf32> to vector<1x2x128xf32>
    tpu.vector_store %arg5[%c0_3, %c0_4, %c0_5], %12 {strides = array<i32>} : memref<1x2x128xf32, #tpu.memory_space<vmem>>, vector<1x2x128xf32>,
    return
  }
  func.func @transform_0(%arg0: i32, %arg1: i32) -> i32 {
    %c0_i32 = arith.constant 0 : i32
    %c0_i32_0 = arith.constant 0 : i32
    return %c0_i32 : i32
  }
  func.func @transform_1(%arg0: i32, %arg1: i32) -> i32 {
    %c0_i32 = arith.constant 0 : i32
    %c0_i32_0 = arith.constant 0 : i32
    return %c0_i32 : i32
  }
  func.func @transform_2(%arg0: i32, %arg1: i32) -> (i32, i32, i32) {
    %c0_i32 = arith.constant 0 : i32
    %c0_i32_0 = arith.constant 0 : i32
    return %arg0, %arg1, %c0_i32 : i32, i32, i32
  }
  func.func @transform_3(%arg0: i32, %arg1: i32) -> (i32, i32, i32) {
    %c0_i32 = arith.constant 0 : i32
    %c0_i32_0 = arith.constant 0 : i32
    return %arg0, %arg1, %c0_i32 : i32, i32, i32
  }
}

</mosaic_0001>

<llo_original>
// kernel: tpu_custom_call.1
$region0: #{tpu_custom_call.1}
  #allocation0 [shape = 'u32[]', space=smem, size = 0x4, offset = 0x4, fixed_abs, tag = 'smem constant byte address 0x4 - core index']
  #allocation1 [shape = 'u32[72,128]{1,0:T(1,128)}', space=vmem, size = 0x9000, scoped, tag = 'internal scratch']
  #allocation2 [shape = 'f32[1]{0:T(128)S(6)}', space=smem, size = 0x200, scoped, tag = 'scoped memory for tpu_custom_call.1']
  %s0 = inlined_call_operand.vmem [shape: f32[4], index: 0, kind: input, shape index: {}]
  %s1 = inlined_call_operand.<no memory space> [shape: f32[1], index: 1, kind: input, shape index: {}]
  %s2 = inlined_call_operand.vmem [shape: u8[4,2,128], index: 2, kind: input, shape index: {}]
  %s3 = inlined_call_operand.hbm [shape: f32[4,2,128], index: 3, kind: output, shape index: {}]
  %s4 = sld [smem:[#allocation0]]
  $region49: #{tpu_custom_call.1} parent=0
    _
  %s6 = ssub.s32 1, %s4
  %s7 = scalar_select 0, %s6, %s4
  %8 = sst [smem:[#allocation2]] %s1
  $region1: #{tpu_custom_call.1} parent=0
    #allocation3 [shape = 'u8[512]{0}', space=smem, size = 0x200, scoped, tag = 'input window, operand 0, single buffered']
    #allocation4 [shape = 's32[2]{0}', space=sflag, size = 0x8, scoped, tag = 'scoped memory for tpu_custom_call.1']
    #allocation5 [shape = 's32[2]{0}', space=sflag, size = 0x8, scoped, tag = 'scoped memory for tpu_custom_call.1']
    #allocation6 [shape = 'u8[2048]{0}', space=vmem, size = 0x800, scoped, tag = 'output window, operand 0']
    %9 = vsyncpa [#allocation5], 0
    %10 = vsyncpa [#allocation4], 0
    %s11 = scalar_lea.sflag [#allocation4], 1
    %12 = vsyncpa %s11, 0
    loop: start=0, step=1, limit=6
    $region2: #{tpu_custom_call.1} parent=1 // loop_pre_header
      _
    $region3: #{tpu_custom_call.1} parent=1 // loop_header
      %s14 = sphi 0, %s18
      %p15 = scmp.ge.s32.totalorder %s14, 6
      %s21 = sphi 0, %s33
      %s22 = sphi 0, %s29
      %s23 = sphi 0, %s21
      %s24 = sphi 0, %s22
      %s25 = sphi 0, %s23
      %s26 = sphi 0, %s24
      %s34 = sphi 0, %s34
      %s36 = sphi 0, %s34
      %s37 = sphi 0, %s36
      %s51 = sphi 0, %s37
      %s55 = sphi 0, %s55
      %s57 = sphi 0, %s55
      %s58 = sphi 0, %s57
      %s72 = sphi 0, %s58
      %s80 = sphi 0, %s82
      %s83 = sphi 0, %s80
      %s84 = sphi 0, %s83
      %s100 = sphi 0, %s84
      %s108 = sphi 0, %s110
      %s111 = sphi 0, %s108
      %s112 = sphi 0, %s111
      %s128 = sphi 0, %s112
    $region4: #{tpu_custom_call.1} parent=1 // loop_header_branch
      %17 = sbr.rel (%p15) target = $region8
    $region5: #{tpu_custom_call.1} parent=1 // loop_body
      %s19 = ssub.s32 %s14, 1
      %s20 = ssub.s32 %s14, 2
      %s27 = sadd.s32 1, %s22
      %p28 = scmp.ge.s32.totalorder %s27, 1
      %s29 = scalar_select %p28, 0, %s27
      %s30 = sadd.s32 1, %s21
      %s31 = scalar_select %p28, %s30, %s21
      %p32 = scmp.ge.s32.totalorder %s31, 4
      %s33 = scalar_select %p32, 0, %s31
      %s35 = sadd.s32 %s34, 1
      %p38 = scmp.eq.s32.totalorder %s14, 3
      %p39 = scmp.ne.s32.totalorder %s34, %s36
      %p40 = scmp.eq.s32.totalorder %s14, 0
      %p41 = por %p39, %p40
      %p42 = scmp.ne.s32.totalorder %s34, %s36
      %p43 = scmp.eq.s32.totalorder %s19, 3
      %p44 = por %p42, %p43
      %p45 = scmp.ne.s32.totalorder %s36, %s37
      %p46 = scmp.eq.s32.totalorder %s19, 0
      %p47 = por %p45, %p46
      %p48 = scmp.ne.s32.totalorder %s36, %s37
      %p49 = scmp.eq.s32.totalorder %s20, 3
      %p50 = por %p48, %p49
      %p52 = scmp.ne.s32.totalorder %s37, %s51
      %p53 = scmp.eq.s32.totalorder %s20, 0
      %p54 = por %p52, %p53
      %s56 = sadd.s32 %s55, 1
      %p59 = scmp.eq.s32.totalorder %s14, 3
      %p60 = scmp.ne.s32.totalorder %s55, %s57
      %p61 = scmp.eq.s32.totalorder %s14, 0
      %p62 = por %p60, %p61
      %p63 = scmp.ne.s32.totalorder %s55, %s57
      %p64 = scmp.eq.s32.totalorder %s19, 3
      %p65 = por %p63, %p64
      %p66 = scmp.ne.s32.totalorder %s57, %s58
      %p67 = scmp.eq.s32.totalorder %s19, 0
      %p68 = por %p66, %p67
      %p69 = scmp.ne.s32.totalorder %s57, %s58
      %p70 = scmp.eq.s32.totalorder %s20, 3
      %p71 = por %p69, %p70
      %p73 = scmp.ne.s32.totalorder %s58, %s72
      %p74 = scmp.eq.s32.totalorder %s20, 0
      %p75 = por %p73, %p74
      %s76 = ssub.s32 %s21, %s33
      %s77 = ssub.s32 %s22, %s29
      %s78 = sor.u32 %s76, %s77
      %p79 = scmp.eq.s32.totalorder %s78, 0
      %s81 = sadd.s32 %s80, 1
      %s82 = scalar_select %p79, %s80, %s81
      %p85 = pneg %p79
      %p86 = scmp.eq.s32.totalorder %s14, 3
      %p87 = por %p85, %p86
      %p88 = scmp.ne.s32.totalorder %s80, %s83
      %p89 = scmp.eq.s32.totalorder %s14, 0
      %p90 = por %p88, %p89
      %p91 = scmp.ne.s32.totalorder %s80, %s83
      %p92 = scmp.eq.s32.totalorder %s19, 3
      %p93 = por %p91, %p92
      %p94 = scmp.ne.s32.totalorder %s83, %s84
      %p95 = scmp.eq.s32.totalorder %s19, 0
      %p96 = por %p94, %p95
      %p97 = scmp.ne.s32.totalorder %s83, %s84
      %p98 = scmp.eq.s32.totalorder %s20, 3
      %p99 = por %p97, %p98
      %p101 = scmp.ne.s32.totalorder %s84, %s100
      %p102 = scmp.eq.s32.totalorder %s20, 0
      %p103 = por %p101, %p102
      %s104 = ssub.s32 %s21, %s33
      %s105 = ssub.s32 %s22, %s29
      %s106 = sor.u32 %s104, %s105
      %p107 = scmp.eq.s32.totalorder %s106, 0
      %s109 = sadd.s32 %s108, 1
      %s110 = scalar_select %p107, %s108, %s109
      %p113 = pneg %p107
      %p114 = scmp.eq.s32.totalorder %s14, 3
      %p115 = por %p113, %p114
      %p116 = scmp.ne.s32.totalorder %s108, %s111
      %p117 = scmp.eq.s32.totalorder %s14, 0
      %p118 = por %p116, %p117
      %p119 = scmp.ne.s32.totalorder %s108, %s111
      %p120 = scmp.eq.s32.totalorder %s19, 3
      %p121 = por %p119, %p120
      %p122 = scmp.ne.s32.totalorder %s111, %s112
      %p123 = scmp.eq.s32.totalorder %s19, 0
      %p124 = por %p122, %p123
      %p125 = scmp.ne.s32.totalorder %s111, %s112
      %p126 = scmp.eq.s32.totalorder %s20, 3
      %p127 = por %p125, %p126
      %p129 = scmp.ne.s32.totalorder %s112, %s128
      %p130 = scmp.eq.s32.totalorder %s20, 0
      %p131 = por %p129, %p130
      %p132 = scmp.le.s32.totalorder 1, %s14
      %p133 = scmp.lt.s32.totalorder %s14, 5
      %p134 = pnand %p132, %p133
      %p135 = pneg %p134
      // Predicated region
      $region9: #{tpu_custom_call.1} parent=5 // pred_check
        _
      $region10: #{tpu_custom_call.1} parent=5 // pred_check_branch
        %137 = sbr.rel (%p134) target = $region12
      $region11: #{tpu_custom_call.1} parent=5 // pred_region
        %s138 = ssub.s32 %s14, 1
        // Predicated region
        $region13: #{tpu_custom_call.1} parent=11 // pred_check
          %p139 = pneg %p47
        $region14: #{tpu_custom_call.1} parent=11 // pred_check_branch
          %141 = sbr.rel (%p139) target = $region16
        $region15: #{tpu_custom_call.1} parent=11 // pred_region
          %143 = vsyncadd [#allocation5], 0
          %s145 = sshll.u32 %s0, 4
          %s146 = int_to_ptr.vmem [resolvable:$true] %s145
          %148 = dma.vmem_to_smem %s146, 16, [#allocation3], [#allocation5]
        $region16: #{tpu_custom_call.1} parent=11 // pred_fallthru
          _
        // Predicated region
        $region17: #{tpu_custom_call.1} parent=11 // pred_check
          %p149 = pneg %p68
        $region18: #{tpu_custom_call.1} parent=11 // pred_check_branch
          %151 = sbr.rel (%p149) target = $region20
        $region19: #{tpu_custom_call.1} parent=11 // pred_region
          _
        $region20: #{tpu_custom_call.1} parent=11 // pred_fallthru
          _
      $region12: #{tpu_custom_call.1} parent=5 // pred_fallthru
        _
      %p152 = scmp.lt.s32.totalorder %s14, 4
      // Predicated region
      $region21: #{tpu_custom_call.1} parent=5 // pred_check
        %p153 = pneg %p152
      $region22: #{tpu_custom_call.1} parent=5 // pred_check_branch
        %155 = sbr.rel (%p153) target = $region24
      $region23: #{tpu_custom_call.1} parent=5 // pred_region
        // Predicated region
        $region25: #{tpu_custom_call.1} parent=23 // pred_check
          %p156 = pneg %p90
        $region26: #{tpu_custom_call.1} parent=23 // pred_check_branch
          %158 = sbr.rel (%p156) target = $region28
        $region27: #{tpu_custom_call.1} parent=23 // pred_region
          %p159 = scmp.lt.s32.totalorder %s21, 3
          %s160 = scalar_select %p159, %s21, 3
          %p161 = scmp.lt.s32.totalorder %s22, 0
          %s162 = scalar_select %p161, %s22, 0
          %s163 = sadd.s32 %s162, %s160
          %s164 = scalar_lea.vmem %s2, %s163
        $region28: #{tpu_custom_call.1} parent=23 // pred_fallthru
          _
      $region24: #{tpu_custom_call.1} parent=5 // pred_fallthru
        _
      %p165 = scmp.le.s32.totalorder 1, %s14
      %p166 = scmp.lt.s32.totalorder %s14, 5
      %p167 = pnand %p165, %p166
      %p168 = pneg %p167
      // Predicated region
      $region29: #{tpu_custom_call.1} parent=5 // pred_check
        _
      $region30: #{tpu_custom_call.1} parent=5 // pred_check_branch
        %170 = sbr.rel (%p167) target = $region32
      $region31: #{tpu_custom_call.1} parent=5 // pred_region
        %s171 = ssub.s32 %s14, 1
        // Predicated region
        $region33: #{tpu_custom_call.1} parent=31 // pred_check
          %p172 = pneg %p47
        $region34: #{tpu_custom_call.1} parent=31 // pred_check_branch
          %174 = sbr.rel (%p172) target = $region36
        $region35: #{tpu_custom_call.1} parent=31 // pred_region
          %176 = dma.done [#allocation5], 16
        $region36: #{tpu_custom_call.1} parent=31 // pred_fallthru
          _
        %177 = sfence
        %p178 = pneg %p47
        %p179 = pneg %p44
        %p180 = pneg %p68
        %p181 = pneg %p65
        %p182 = scmp.lt.s32.totalorder %s23, 3
        %s183 = scalar_select %p182, %s23, 3
        %p184 = scmp.lt.s32.totalorder %s24, 0
        %s185 = scalar_select %p184, %s24, 0
        %s186 = sadd.s32 %s185, %s183
        %s187 = scalar_lea.vmem %s2, %s186
        %p188 = pneg %p96
        %p189 = pneg %p93
        %p190 = pneg %p124
        %p191 = pneg %p121
        %s192 = sand.u32 %s111, 1
        %s193 = scalar_lea.sflag [#allocation4], %s192
        %s194 = sand.u32 %s111, 1
        %s195 = smul.addr %s194, 2
        %s196 = scalar_lea.vmem [#allocation6], %s195
        %p197 = scmp.lt.s32.totalorder %s23, 3
        %s198 = scalar_select %p197, %s23, 3
        %p199 = scmp.lt.s32.totalorder %s24, 0
        %s200 = scalar_select %p199, %s24, 0
        %s201 = sadd.s32 %s200, %s198
        %s202 = scalar_lea.vmem %s2, %s201
        %s203 = sld [smem:[#allocation3 + %s23]]
        %s204 = sld [smem:[#allocation2]]
        %v205 = vld [vmem:[%s202] sm:$0x1]
        %v206 = vunpack.c.0.s8 %v205
        %v207 = vand.u32 %v206, 255
        %v208 = vcvt.s32.f32 %v207
        %v209 = vstv %s203
        %v210 = vmul.f32 %v208, %v209
        %v211 = vstv %s204
        %v212 = vadd.f32 %v210, %v211
        %213 = vst [vmem:[%s196] sm:$0x3] %v212
        %s214 = sand.u32 %s111, 1
        %s215 = scalar_lea.sflag [#allocation4], %s214
        %s216 = sand.u32 %s111, 1
        %s217 = smul.addr %s216, 2
        %s218 = scalar_lea.vmem [#allocation6], %s217
        // Predicated region
        $region37: #{tpu_custom_call.1} parent=31 // pred_check
          %p219 = pneg %p121
        $region38: #{tpu_custom_call.1} parent=31 // pred_check_branch
          %221 = sbr.rel (%p219) target = $region40
        $region39: #{tpu_custom_call.1} parent=31 // pred_region
          %223 = vsyncadd %s215, 0
          %s224 = sadd.s32 %s24, %s23
          %s225 = smul.addr %s224, 2
          %s226 = scalar_lea.hbm %s3, %s225
          %s228 = sshll.u32 %s218, 4
          %s229 = int_to_ptr.vmem [resolvable:$true] %s228
          %s230 = sshll.u32 %s226, 4
          %s231 = int_to_ptr.hbm [resolvable:$true] %s230
          %233 = dma.vmem_to_hbm [thread:$0]  %s229, 32, %s231, %s215
        $region40: #{tpu_custom_call.1} parent=31 // pred_fallthru
          _
      $region32: #{tpu_custom_call.1} parent=5 // pred_fallthru
        _
      %p234 = scmp.le.s32.totalorder 2, %s14
      // Predicated region
      $region41: #{tpu_custom_call.1} parent=5 // pred_check
        %p235 = pneg %p234
      $region42: #{tpu_custom_call.1} parent=5 // pred_check_branch
        %237 = sbr.rel (%p235) target = $region44
      $region43: #{tpu_custom_call.1} parent=5 // pred_region
        %s238 = ssub.s32 %s14, 2
        // Predicated region
        $region45: #{tpu_custom_call.1} parent=43 // pred_check
          %p239 = pneg %p127
        $region46: #{tpu_custom_call.1} parent=43 // pred_check_branch
          %241 = sbr.rel (%p239) target = $region48
        $region47: #{tpu_custom_call.1} parent=43 // pred_region
          %s242 = sand.u32 %s112, 1
          %s243 = scalar_lea.sflag [#allocation4], %s242
          %s244 = sand.u32 %s112, 1
          %s245 = smul.addr %s244, 2
          %s246 = scalar_lea.vmem [#allocation6], %s245
          %248 = dma.done %s243, 32
        $region48: #{tpu_custom_call.1} parent=43 // pred_fallthru
          _
      $region44: #{tpu_custom_call.1} parent=5 // pred_fallthru
        _
    $region6: #{tpu_custom_call.1} parent=1 // loop_footer
      %s18 = sadd.s32 1, %s14
    $region7: #{tpu_custom_call.1} parent=1 // loop_footer_branch
      %13 = sbr.rel target = $region3
    $region8: #{tpu_custom_call.1} parent=1 // loop_exit
      _
    %249 = vsyncpa [#allocation4], 1
    %s250 = scalar_lea.sflag [#allocation4], 1
    %251 = vsyncpa %s250, 1
    %252 = vsyncpa [#allocation5], 1
    %s253 = scalar_lea.sflag [#allocation5], 1
    %254 = vsyncpa %s253, 1

</llo_original>
